<compile_context>
chip_gen: v6e
topology: v6e:2x2x1
jax: 0.10.0
libtpu: 0.0.40
codegen_flags: <defaults>
</compile_context>

<pallas_src>
import jax
import jax.numpy as jnp
from jax.experimental import pallas as pl
from jax.experimental.pallas import tpu as pltpu


def _channel_pad_kernel(x_ref, o_ref):
    # x_ref: (1, row_tile, lane)   o_ref: (2, row_tile, lane)
    v = x_ref[0]
    o_ref[0] = v
    o_ref[1] = jnp.zeros_like(v)


def _choose_layout(total, fallback_lane):
    """Factor `total` into (rows, lane) with a lane-dense lane when possible."""
    for lane in (1024, 512, 256, 128):
        if total % lane == 0:
            return total // lane, lane
    # Any exact factorisation is correct (block uses the full lane extent);
    # H*W keeps the natural memory order.
    return total // fallback_lane, fallback_lane


def _pick_row_tile(rows, lane, itemsize, target_bytes=2 * 1024 * 1024):
    """~2 MiB input blocks; prefer sublane-aligned divisors of `rows`."""
    sub = max(8, 32 // itemsize)          # 8 for f32, 16 for bf16, 32 for i8/fp8
    max_rt = max(sub, target_bytes // (lane * itemsize))
    if rows <= max_rt:
        return rows                        # full-dim block is always layout-legal
    # Largest sublane-aligned divisor of rows at or below the target: the tail
    # block is then full-size (no masked partial vst on the last step).
    best = None
    for rt in range(sub, max_rt + 1, sub):
        if rows % rt == 0:
            best = rt
    if best is not None:
        return best
    # Fall back to a sublane-aligned non-divisor (masked tail on last block).
    return max(sub, (max_rt // sub) * sub)


def channel_pad2d(x, num_channels):
    """Pallas equivalent of ChannelPad2d.forward (torch.cat along dim 0)."""
    n, c, h, w = x.shape
    if num_channels != c:
        # torch.cat along dim 0 requires matching channel counts.
        raise ValueError(
            f"ChannelPad2d: num_channels ({num_channels}) must equal x.shape[1] ({c})")

    total = n * c * h * w
    itemsize = jnp.dtype(x.dtype).itemsize
    rows, lane = _choose_layout(total, h * w)
    row_tile = _pick_row_tile(rows, lane, itemsize)
    grid = (pl.cdiv(rows, row_tile),)

    x3 = x.reshape(1, rows, lane)          # free reshape of contiguous data

    out3 = pl.pallas_call(
        _channel_pad_kernel,
        out_shape=jax.ShapeDtypeStruct((2, rows, lane), x.dtype),
        grid_spec=pltpu.PrefetchScalarGridSpec(
            num_scalar_prefetch=0,
            grid=grid,
            in_specs=[
                pl.BlockSpec((1, row_tile, lane), lambda j: (0, j, 0)),
            ],
            # Fused output block: slice 0 is the copy, slice 1 the zero half.
            out_specs=pl.BlockSpec((2, row_tile, lane), lambda j: (0, j, 0)),
        ),
        compiler_params=pltpu.CompilerParams(
            dimension_semantics=("parallel",),
            vmem_limit_bytes=32 << 20),
        cost_estimate=pl.CostEstimate(
            flops=0, transcendentals=0, bytes_accessed=3 * total * itemsize),
    )(x3)

    # (2, rows, lane) is the flat [x | zeros] buffer -> reinterpret as batch cat.
    return out3.reshape(2 * n, c, h, w)


if __name__ == "__main__":
    key = jax.random.PRNGKey(0)

    # Main example: batch=2, channels=4, spatial=16x16 (num_channels == C).
    n, c, h, w = 2, 4, 16, 16
    x = jax.random.normal(key, (n, c, h, w), dtype=jnp.float32)
    y = channel_pad2d(x, num_channels=c)
    jax.block_until_ready(y)

    y_ref = jnp.concatenate(
        [x, jnp.zeros((n, c, h, w), dtype=x.dtype)], axis=0)
    assert y.shape == (2 * n, c, h, w)
    assert bool(jnp.array_equal(y, y_ref))

    # Secondary check: awkward, non-128-divisible shapes exercise the fallback
    # lane layout and the single-full-block path.
    n2, c2, h2, w2 = 2, 3, 7, 5
    x2 = jax.random.normal(jax.random.PRNGKey(1), (n2, c2, h2, w2),
                           dtype=jnp.float32)
    y2 = channel_pad2d(x2, num_channels=c2)
    jax.block_until_ready(y2)
    y2_ref = jnp.concatenate(
        [x2, jnp.zeros((n2, c2, h2, w2), dtype=x2.dtype)], axis=0)
    assert y2.shape == (2 * n2, c2, h2, w2)
    assert bool(jnp.array_equal(y2, y2_ref))

    # Larger shape: exercises multi-block grid and the divisor-based row tile.
    n3, c3, h3, w3 = 8, 32, 64, 64
    x3 = jax.random.normal(jax.random.PRNGKey(2), (n3, c3, h3, w3),
                           dtype=jnp.float32)
    y3 = channel_pad2d(x3, num_channels=c3)
    jax.block_until_ready(y3)
    y3_ref = jnp.concatenate(
        [x3, jnp.zeros((n3, c3, h3, w3), dtype=x3.dtype)], axis=0)
    assert y3.shape == (2 * n3, c3, h3, w3)
    assert bool(jnp.array_equal(y3, y3_ref))

    print("KERNEL_OK")
</pallas_src>

<mosaic_0001>
module attributes {stable_mosaic.version = 11 : i64} {
  func.func @_channel_pad_kernel(%arg0: i32, %arg1: memref<1x2x1024xf32, #tpu.memory_space<vmem>>, %arg2: memref<2x2x1024xf32, #tpu.memory_space<vmem>>) attributes {dimension_semantics = [#tpu.dimension_semantics<parallel>], iteration_bounds = array<i64: 1>, scalar_prefetch = 0 : i64, scratch_operands = 0 : i64, tpu.core_type = #tpu.core_type<tc>, window_params = [{transform_indices = @transform_0, window_bounds = array<i64: 1, 2, 1024>}, {transform_indices = @transform_1, window_bounds = array<i64: 2, 2, 1024>}]} {
    %c0 = arith.constant 0 : index
    %c0_0 = arith.constant 0 : index
    %c0_1 = arith.constant 0 : index
    %0 = vector.load %arg1[%c0, %c0_0, %c0_1] : memref<1x2x1024xf32, #tpu.memory_space<vmem>>, vector<1x2x1024xf32>
    %1 = vector.shape_cast %0 : vector<1x2x1024xf32> to vector<2x1024xf32>
    %c0_2 = arith.constant 0 : index
    %c0_3 = arith.constant 0 : index
    %c0_4 = arith.constant 0 : index
    %2 = vector.load %arg2[%c0_2, %c0_3, %c0_4] : memref<2x2x1024xf32, #tpu.memory_space<vmem>>, vector<1x2x1024xf32>
    %3 = vector.shape_cast %2 : vector<1x2x1024xf32> to vector<2x1024xf32>
    %4 = vector.shape_cast %1 : vector<2x1024xf32> to vector<1x2x1024xf32>
    tpu.vector_store %arg2[%c0_2, %c0_3, %c0_4], %4 {strides = array<i32>} : memref<2x2x1024xf32, #tpu.memory_space<vmem>>, vector<1x2x1024xf32>,
    %cst = arith.constant 0.000000e+00 : f32
    %5 = vector.broadcast %cst : f32 to vector<2x1024xf32>
    %c1 = arith.constant 1 : index
    %c0_5 = arith.constant 0 : index
    %c0_6 = arith.constant 0 : index
    %6 = vector.load %arg2[%c1, %c0_5, %c0_6] : memref<2x2x1024xf32, #tpu.memory_space<vmem>>, vector<1x2x1024xf32>
    %7 = vector.shape_cast %6 : vector<1x2x1024xf32> to vector<2x1024xf32>
    %8 = vector.shape_cast %5 : vector<2x1024xf32> to vector<1x2x1024xf32>
    tpu.vector_store %arg2[%c1, %c0_5, %c0_6], %8 {strides = array<i32>} : memref<2x2x1024xf32, #tpu.memory_space<vmem>>, vector<1x2x1024xf32>,
    return
  }
  func.func @transform_0(%arg0: i32) -> (i32, i32, i32) {
    %c0_i32 = arith.constant 0 : i32
    %c0_i32_0 = arith.constant 0 : i32
    %c0_i32_1 = arith.constant 0 : i32
    return %c0_i32, %arg0, %c0_i32_0 : i32, i32, i32
  }
  func.func @transform_1(%arg0: i32) -> (i32, i32, i32) {
    %c0_i32 = arith.constant 0 : i32
    %c0_i32_0 = arith.constant 0 : i32
    %c0_i32_1 = arith.constant 0 : i32
    return %c0_i32, %arg0, %c0_i32_0 : i32, i32, i32
  }
}

</mosaic_0001>

<llo_original>
// kernel: tpu_custom_call.1
$region0: #{tpu_custom_call.1}
  #allocation0 [shape = 'u32[]', space=smem, size = 0x4, offset = 0x4, fixed_abs, tag = 'smem constant byte address 0x4 - core index']
  #allocation1 [shape = 'u32[144,128]{1,0:T(1,128)}', space=vmem, size = 0x12000, scoped, tag = 'internal scratch']
  %s0 = inlined_call_operand.hbm [shape: f32[1,2,1024], index: 0, kind: input, shape index: {}]
  %s1 = inlined_call_operand.hbm [shape: f32[2,2,1024], index: 1, kind: output, shape index: {}]
  %s2 = sld [smem:[#allocation0]]
  $region18: #{tpu_custom_call.1} parent=0
    _
  %s4 = ssub.s32 1, %s2
  %s5 = scalar_select 0, %s4, %s2
  $region1: #{tpu_custom_call.1} parent=0
    #allocation2 [shape = 'u8[8192]{0}', space=vmem, size = 0x2000, scoped, tag = 'input window, operand 0, single buffered']
    #allocation3 [shape = 's32[1]{0}', space=sflag, size = 0x4, scoped, tag = 'scoped memory for tpu_custom_call.1']
    #allocation4 [shape = 's32[1]{0}', space=sflag, size = 0x4, scoped, tag = 'scoped memory for tpu_custom_call.1']
    #allocation5 [shape = 'u8[16384]{0}', space=vmem, size = 0x4000, scoped, tag = 'output window, operand 0, single buffered']
    %6 = vsyncpa [#allocation3], 0
    %7 = vsyncpa [#allocation4], 0
    // Predicated region
    $region2: #{tpu_custom_call.1} parent=1 // pred_check
      _
    $region3: #{tpu_custom_call.1} parent=1 // pred_check_branch
      %9 = sbr.rel (0) target = $region5
    $region4: #{tpu_custom_call.1} parent=1 // pred_region
      %s11 = ssub.s32 256, 256
      %12 = vsyncadd [#allocation3], %s11
      %s14 = sshll.u32 [#allocation2], 4
      %s15 = int_to_ptr.vmem [resolvable:$true] %s14
      %17 = dma.hbm_to_vmem [thread:$0]  %s0, 256, %s15, [#allocation3]
    $region5: #{tpu_custom_call.1} parent=1 // pred_fallthru
      _
    // Predicated region
    $region6: #{tpu_custom_call.1} parent=1 // pred_check
      _
    $region7: #{tpu_custom_call.1} parent=1 // pred_check_branch
      %19 = sbr.rel (0) target = $region9
    $region8: #{tpu_custom_call.1} parent=1 // pred_region
      %20 = dma.done [#allocation3], 256
    $region9: #{tpu_custom_call.1} parent=1 // pred_fallthru
      _
    %v21 = vld [vmem:[#allocation2] sm:$0xff]
    %v22 = vld [vmem:[#allocation2 + $0x8] sm:$0xff]
    %23 = vst [vmem:[#allocation5] sm:$0xff] %v21
    %24 = vst [vmem:[#allocation5 + $0x8] sm:$0xff] %v22
    %s25 = scalar_lea.vmem [#allocation5], 16
    %26 = vst [vmem:[%s25] sm:$0xff] 0.0
    %27 = vst [vmem:[%s25 + $0x8] sm:$0xff] 0.0
    // Predicated region
    $region10: #{tpu_custom_call.1} parent=1 // pred_check
      _
    $region11: #{tpu_custom_call.1} parent=1 // pred_check_branch
      %29 = sbr.rel (0) target = $region13
    $region12: #{tpu_custom_call.1} parent=1 // pred_region
      %s31 = ssub.s32 512, 512
      %32 = vsyncadd [#allocation4], %s31
      %s33 = sshll.u32 [#allocation5], 4
      %s34 = int_to_ptr.vmem [resolvable:$true] %s33
      %39 = dma.vmem_to_hbm [thread:$0]  %s34, 512, %s1, [#allocation4], 256, 256, 16
    $region13: #{tpu_custom_call.1} parent=1 // pred_fallthru
      _
    // Predicated region
    $region14: #{tpu_custom_call.1} parent=1 // pred_check
      _
    $region15: #{tpu_custom_call.1} parent=1 // pred_check_branch
      %41 = sbr.rel (0) target = $region17
    $region16: #{tpu_custom_call.1} parent=1 // pred_region
      %42 = dma.done [#allocation4], 512
    $region17: #{tpu_custom_call.1} parent=1 // pred_fallthru
      _
    %43 = vsyncpa [#allocation3], 1
    %44 = vsyncpa [#allocation4], 1

</llo_original>
